<compile_context>
chip_gen: v7x
topology: tpu7x:2x2x1
jax: 0.10.0
libtpu: 0.0.40
codegen_flags: <defaults>
</compile_context>

<pallas_src>
import numpy as np

import jax
import jax.numpy as jnp
from jax.experimental import pallas as pl
from jax.experimental.pallas import tpu as pltpu


def _down_kernel(x_ref, m_ref, b_ref, o_ref):
    """One (batch, H-block) tile.

    x_ref : VMEM (1, C, TH, W)   NCHW input tile
    m_ref : VMEM (C, W, C*Wo)    weighted tap-selection (conv weights folded in)
    b_ref : VMEM (1, C*Wo)       bias row (bias[co] repeated Wo times)
    o_ref : VMEM (1, TH, C*Wo)   lane-dense output slab
    """
    C = x_ref.shape[1]
    # Whole conv = C accumulated MXU dots; gather + channel mix in one matmul.
    acc = jnp.dot(x_ref[0, 0], m_ref[0], preferred_element_type=jnp.float32)
    for ci in range(1, C):
        acc = acc + jnp.dot(x_ref[0, ci], m_ref[ci],
                            preferred_element_type=jnp.float32)
    # TODO(synk): for very large C (>=128) switch to a lax.fori_loop over ci
    # (VMEM accumulator) or the (C,3C)@(3C,TH*Wo) formulation to bound trace
    # size and M's footprint.
    o_ref[0, :, :] = (acc + b_ref[...]).astype(o_ref.dtype)


def _tpu_vmem_and_cores():
    """Best-effort per-core VMEM capacity and TensorCore count."""
    vmem = 64 * 2**20   # conservative default: v7x per-TC physical VMEM
    cores = 1
    try:
        info = pltpu.get_tpu_info()
        vmem = int(getattr(info, "vmem_capacity_bytes", vmem))
        for attr in ("num_tensorcores", "tensorcore_count", "num_cores",
                     "core_count"):
            v = getattr(info, attr, None)
            if v:
                cores = int(v)
                break
    except Exception:
        pass
    return vmem, cores


def _plan_tiles(B, C, H, W, N, vmem_capacity, num_cores):
    """Pick the H tile and a vmem limit from an explicit footprint model."""
    def rup(v, m):
        return -(-v // m) * m

    def footprint(th):
        x_blk = C * rup(th, 8) * rup(W, 128) * 4          # input tile
        o_blk = rup(th, 8) * rup(N, 128) * 4              # output slab
        m_cst = C * rup(W, 8) * rup(N, 128) * 4           # weighted sel matrix
        b_cst = 8 * rup(N, 128) * 4                       # bias row
        acc = rup(th, 8) * rup(N, 128) * 4                # live f32 accumulator
        # x/o are double-buffered by the pipeline; the constant M/bias blocks
        # also get two buffers by default (index map never changes, but the
        # allocation is still 2x), so count everything.
        return 2 * (x_blk + o_blk) + 2 * (m_cst + b_cst) + acc

    budget = int(0.45 * vmem_capacity)
    cands = [d for d in range(8, H + 1, 8) if H % d == 0]
    if not cands:
        th = H  # full-dim exemption from the (8,128) rule
    else:
        fits = [d for d in cands if footprint(d) <= budget] or [min(cands)]
        th = max(fits)
        if num_cores > 1:
            # Only multi-TC parts benefit from extra grid steps; on 1-TC parts
            # shrinking the tile just adds per-step overhead.
            while B * (H // th) < 2 * num_cores:
                smaller = [d for d in fits if d < th]
                if not smaller:
                    break
                th = max(smaller)

    fp = footprint(th)
    vmem_limit = int(min(max(fp + fp // 2, 16 * 2**20),
                         int(0.95 * vmem_capacity)))
    return th, vmem_limit


@jax.jit
def downsample_forward(x, weight, bias):
    """x: (B, C, H, W) float32 NCHW; weight: (C, C, 1, 3); bias: (C,).
    Returns (B, C, H, Wo), Wo = (W - 1)//2 + 1, matching
    nn.Conv2d(C, C, kernel_size=(1,3), stride=(1,2), padding=(0,1)).
    """
    B, C, H, W = x.shape
    Wo = (W + 1) // 2          # == (W - 1)//2 + 1
    N = C * Wo

    # Constant 0/1 tap selection: sel[w, k, wo] = 1 iff w == 2*wo + k - 1 and
    # 0 <= w < W (out-of-range taps are the conv's zero padding -> stay 0, so
    # odd W needs no input padding pass).
    sel_np = np.zeros((W, 3, Wo), np.float32)
    for k in range(3):
        for wo in range(Wo):
            w = 2 * wo + k - 1
            if 0 <= w < W:
                sel_np[w, k, wo] = 1.0
    sel = jnp.asarray(sel_np)                                    # (W, 3, Wo)

    # Fold weights into M[ci, w, co*Wo + wo]; pure 0/1 mask-and-sum, exact f32.
    w3 = weight[:, :, 0, :].astype(jnp.float32)                  # (Co, Ci, 3)
    m4 = jnp.sum(
        sel[None, :, None, :, :]                                  # (1,W,1,3,Wo)
        * jnp.transpose(w3, (1, 0, 2))[:, None, :, :, None],     # (Ci,1,Co,3,1)
        axis=3)                                                   # (Ci,W,Co,Wo)
    m = m4.reshape(C, W, N)
    bias_row = jnp.repeat(bias.astype(jnp.float32), Wo).reshape(1, N)

    vmem_cap, n_cores = _tpu_vmem_and_cores()
    th, vmem_limit = _plan_tiles(B, C, H, W, N, vmem_cap, n_cores)
    grid = (B, H // th)

    out = pl.pallas_call(
        _down_kernel,
        out_shape=jax.ShapeDtypeStruct((B, H, N), x.dtype),
        grid_spec=pltpu.PrefetchScalarGridSpec(
            num_scalar_prefetch=0,
            grid=grid,
            in_specs=[
                pl.BlockSpec((1, C, th, W), lambda b, h: (b, 0, h, 0)),
                # Constant blocks (block index never changes).
                # TODO(synk): pipeline_mode=pl.Buffered(1) would reclaim their
                # second VMEM buffer on v7x; kept default for portability.
                pl.BlockSpec((C, W, N), lambda b, h: (0, 0, 0)),
                pl.BlockSpec((1, N), lambda b, h: (0, 0)),
            ],
            out_specs=pl.BlockSpec((1, th, N), lambda b, h: (b, h, 0)),
        ),
        compiler_params=pltpu.CompilerParams(
            dimension_semantics=("parallel", "parallel"),
            vmem_limit_bytes=vmem_limit,
        ),
    )(x, m, bias_row)

    # Layout plumbing only: (B, H, C*Wo) -> NCHW (B, C, H, Wo).
    return jnp.transpose(out.reshape(B, H, C, Wo), (0, 2, 1, 3))


def _reference(x, weight, bias):
    # Pure-JAX reference conv for verification.
    y = jax.lax.conv_general_dilated(
        x, weight,
        window_strides=(1, 2),
        padding=((0, 0), (1, 1)),
        dimension_numbers=("NCHW", "OIHW", "NCHW"),
        precision=jax.lax.Precision.HIGHEST,
    )
    return y + bias.reshape(1, -1, 1, 1)


if __name__ == "__main__":
    key = jax.random.PRNGKey(0)
    kx, kw, kb = jax.random.split(key, 3)

    B, C, H, W = 2, 4, 16, 16
    x = jax.random.normal(kx, (B, C, H, W), dtype=jnp.float32)
    # Deterministic synthetic Conv2d params (c_in == c_out == C, kernel (1,3)).
    weight = jax.random.normal(kw, (C, C, 1, 3), dtype=jnp.float32) * 0.1
    bias = jax.random.normal(kb, (C,), dtype=jnp.float32) * 0.1
    # t / supports are ignored by the module's forward.
    t = jax.random.normal(key, (B,), dtype=jnp.float32)
    supports = None

    y = downsample_forward(x, weight, bias)
    y = jax.block_until_ready(y)
    y_ref = _reference(x, weight, bias)
    assert y.shape == (B, C, H, (W - 1) // 2 + 1), y.shape
    assert jnp.allclose(y, y_ref, atol=1e-4, rtol=1e-4), "mismatch vs reference"

    # Odd-W case (exercises the no-pad right-edge handling).
    W2 = 15
    x2 = jax.random.normal(kx, (B, C, H, W2), dtype=jnp.float32)
    y2 = jax.block_until_ready(downsample_forward(x2, weight, bias))
    y2_ref = _reference(x2, weight, bias)
    assert y2.shape == (B, C, H, (W2 - 1) // 2 + 1), y2.shape
    assert jnp.allclose(y2, y2_ref, atol=1e-4, rtol=1e-4), "odd-W mismatch"

    print("KERNEL_OK")
</pallas_src>

<mosaic_0001>
module attributes {stable_mosaic.version = 11 : i64} {
  func.func @_down_kernel(%arg0: i32, %arg1: i32, %arg2: memref<1x4x16x16xf32, #tpu.memory_space<vmem>>, %arg3: memref<4x16x32xf32, #tpu.memory_space<vmem>>, %arg4: memref<1x32xf32, #tpu.memory_space<vmem>>, %arg5: memref<1x16x32xf32, #tpu.memory_space<vmem>>) attributes {dimension_semantics = [#tpu.dimension_semantics<parallel>, #tpu.dimension_semantics<parallel>], iteration_bounds = array<i64: 2, 1>, scalar_prefetch = 0 : i64, scratch_operands = 0 : i64, tpu.core_type = #tpu.core_type<tc>, window_params = [{transform_indices = @transform_0, window_bounds = array<i64: 1, 4, 16, 16>}, {pipeline_mode = #tpu.pipeline_mode<synchronous>, transform_indices = @transform_1, window_bounds = array<i64: 4, 16, 32>}, {pipeline_mode = #tpu.pipeline_mode<synchronous>, transform_indices = @transform_2, window_bounds = array<i64: 1, 32>}, {transform_indices = @transform_3, window_bounds = array<i64: 1, 16, 32>}]} {
    %c0 = arith.constant 0 : index
    %c0_0 = arith.constant 0 : index
    %c0_1 = arith.constant 0 : index
    %c0_2 = arith.constant 0 : index
    %0 = vector.load %arg2[%c0, %c0_0, %c0_1, %c0_2] : memref<1x4x16x16xf32, #tpu.memory_space<vmem>>, vector<1x1x16x16xf32>
    %1 = vector.shape_cast %0 : vector<1x1x16x16xf32> to vector<16x16xf32>
    %c0_3 = arith.constant 0 : index
    %c0_4 = arith.constant 0 : index
    %c0_5 = arith.constant 0 : index
    %2 = vector.load %arg3[%c0_3, %c0_4, %c0_5] : memref<4x16x32xf32, #tpu.memory_space<vmem>>, vector<1x16x32xf32>
    %3 = vector.shape_cast %2 : vector<1x16x32xf32> to vector<16x32xf32>
    %cst = arith.constant dense<0.000000e+00> : vector<16x32xf32>
    %4 = tpu.matmul %1, %3, %cst {dimension_numbers = #tpu.dot_dimension_numbers<[1], [0], [0], [1], [0, 0, 1, 1], [], []>} : vector<16x16xf32>, vector<16x32xf32>, vector<16x32xf32> -> vector<16x32xf32>
    %c0_6 = arith.constant 0 : index
    %c1 = arith.constant 1 : index
    %c0_7 = arith.constant 0 : index
    %c0_8 = arith.constant 0 : index
    %5 = vector.load %arg2[%c0_6, %c1, %c0_7, %c0_8] : memref<1x4x16x16xf32, #tpu.memory_space<vmem>>, vector<1x1x16x16xf32>
    %6 = vector.shape_cast %5 : vector<1x1x16x16xf32> to vector<16x16xf32>
    %c1_9 = arith.constant 1 : index
    %c0_10 = arith.constant 0 : index
    %c0_11 = arith.constant 0 : index
    %7 = vector.load %arg3[%c1_9, %c0_10, %c0_11] : memref<4x16x32xf32, #tpu.memory_space<vmem>>, vector<1x16x32xf32>
    %8 = vector.shape_cast %7 : vector<1x16x32xf32> to vector<16x32xf32>
    %cst_12 = arith.constant dense<0.000000e+00> : vector<16x32xf32>
    %9 = tpu.matmul %6, %8, %cst_12 {dimension_numbers = #tpu.dot_dimension_numbers<[1], [0], [0], [1], [0, 0, 1, 1], [], []>} : vector<16x16xf32>, vector<16x32xf32>, vector<16x32xf32> -> vector<16x32xf32>
    %10 = arith.addf %4, %9 : vector<16x32xf32>
    %c0_13 = arith.constant 0 : index
    %c2 = arith.constant 2 : index
    %c0_14 = arith.constant 0 : index
    %c0_15 = arith.constant 0 : index
    %11 = vector.load %arg2[%c0_13, %c2, %c0_14, %c0_15] : memref<1x4x16x16xf32, #tpu.memory_space<vmem>>, vector<1x1x16x16xf32>
    %12 = vector.shape_cast %11 : vector<1x1x16x16xf32> to vector<16x16xf32>
    %c2_16 = arith.constant 2 : index
    %c0_17 = arith.constant 0 : index
    %c0_18 = arith.constant 0 : index
    %13 = vector.load %arg3[%c2_16, %c0_17, %c0_18] : memref<4x16x32xf32, #tpu.memory_space<vmem>>, vector<1x16x32xf32>
    %14 = vector.shape_cast %13 : vector<1x16x32xf32> to vector<16x32xf32>
    %cst_19 = arith.constant dense<0.000000e+00> : vector<16x32xf32>
    %15 = tpu.matmul %12, %14, %cst_19 {dimension_numbers = #tpu.dot_dimension_numbers<[1], [0], [0], [1], [0, 0, 1, 1], [], []>} : vector<16x16xf32>, vector<16x32xf32>, vector<16x32xf32> -> vector<16x32xf32>
    %16 = arith.addf %10, %15 : vector<16x32xf32>
    %c0_20 = arith.constant 0 : index
    %c3 = arith.constant 3 : index
    %c0_21 = arith.constant 0 : index
    %c0_22 = arith.constant 0 : index
    %17 = vector.load %arg2[%c0_20, %c3, %c0_21, %c0_22] : memref<1x4x16x16xf32, #tpu.memory_space<vmem>>, vector<1x1x16x16xf32>
    %18 = vector.shape_cast %17 : vector<1x1x16x16xf32> to vector<16x16xf32>
    %c3_23 = arith.constant 3 : index
    %c0_24 = arith.constant 0 : index
    %c0_25 = arith.constant 0 : index
    %19 = vector.load %arg3[%c3_23, %c0_24, %c0_25] : memref<4x16x32xf32, #tpu.memory_space<vmem>>, vector<1x16x32xf32>
    %20 = vector.shape_cast %19 : vector<1x16x32xf32> to vector<16x32xf32>
    %cst_26 = arith.constant dense<0.000000e+00> : vector<16x32xf32>
    %21 = tpu.matmul %18, %20, %cst_26 {dimension_numbers = #tpu.dot_dimension_numbers<[1], [0], [0], [1], [0, 0, 1, 1], [], []>} : vector<16x16xf32>, vector<16x32xf32>, vector<16x32xf32> -> vector<16x32xf32>
    %22 = arith.addf %16, %21 : vector<16x32xf32>
    %c0_27 = arith.constant 0 : index
    %c0_28 = arith.constant 0 : index
    %23 = vector.load %arg4[%c0_27, %c0_28] : memref<1x32xf32, #tpu.memory_space<vmem>>, vector<1x32xf32>
    %24 = vector.broadcast %23 : vector<1x32xf32> to vector<16x32xf32>
    %25 = arith.addf %22, %24 : vector<16x32xf32>
    %c0_29 = arith.constant 0 : index
    %c0_30 = arith.constant 0 : index
    %c0_31 = arith.constant 0 : index
    %26 = vector.load %arg5[%c0_29, %c0_30, %c0_31] : memref<1x16x32xf32, #tpu.memory_space<vmem>>, vector<1x16x32xf32>
    %27 = vector.shape_cast %26 : vector<1x16x32xf32> to vector<16x32xf32>
    %28 = vector.shape_cast %25 : vector<16x32xf32> to vector<1x16x32xf32>
    tpu.vector_store %arg5[%c0_29, %c0_30, %c0_31], %28 {strides = array<i32>} : memref<1x16x32xf32, #tpu.memory_space<vmem>>, vector<1x16x32xf32>,
    return
  }
  func.func @transform_0(%arg0: i32, %arg1: i32) -> (i32, i32, i32, i32) {
    %c0_i32 = arith.constant 0 : i32
    %c0_i32_0 = arith.constant 0 : i32
    %c0_i32_1 = arith.constant 0 : i32
    return %arg0, %c0_i32, %arg1, %c0_i32_0 : i32, i32, i32, i32
  }
  func.func @transform_1(%arg0: i32, %arg1: i32) -> (i32, i32, i32) {
    %c0_i32 = arith.constant 0 : i32
    %c0_i32_0 = arith.constant 0 : i32
    %c0_i32_1 = arith.constant 0 : i32
    %c0_i32_2 = arith.constant 0 : i32
    return %c0_i32, %c0_i32_0, %c0_i32_1 : i32, i32, i32
  }
  func.func @transform_2(%arg0: i32, %arg1: i32) -> (i32, i32) {
    %c0_i32 = arith.constant 0 : i32
    %c0_i32_0 = arith.constant 0 : i32
    %c0_i32_1 = arith.constant 0 : i32
    return %c0_i32, %c0_i32_0 : i32, i32
  }
  func.func @transform_3(%arg0: i32, %arg1: i32) -> (i32, i32, i32) {
    %c0_i32 = arith.constant 0 : i32
    %c0_i32_0 = arith.constant 0 : i32
    return %arg0, %arg1, %c0_i32 : i32, i32, i32
  }
}

</mosaic_0001>

<llo_original>
// kernel: downsample_forward.1
$region0: #{downsample_forward.1}
  #allocation0 [shape = 'u32[]', space=smem, size = 0x4, offset = 0x4, fixed_abs, tag = 'smem constant byte address 0x4 - core index']
  #allocation1 [shape = 'u32[144,128]{1,0:T(1,128)}', space=vmem, size = 0x12000, scoped, tag = 'internal scratch']
  %s0 = inlined_call_operand.vmem [shape: f32[2,4,16,16], index: 0, kind: input, shape index: {}]
  %s1 = inlined_call_operand.vmem [shape: f32[4,16,32], index: 1, kind: input, shape index: {}]
  %s2 = inlined_call_operand.vmem [shape: f32[1,32], index: 2, kind: input, shape index: {}]
  %s3 = inlined_call_operand.vmem [shape: f32[2,16,32], index: 3, kind: output, shape index: {}]
  %s4 = sld [smem:[#allocation0]]
  $region45: #{downsample_forward.1} parent=0
    _
  %s6 = ssub.s32 1, %s4
  %s7 = scalar_select 0, %s6, %s4
  loop: start=0, step=1, limit=4
  $region2: #{downsample_forward.1} parent=0 // loop_pre_header
    _
  $region3: #{downsample_forward.1} parent=0 // loop_header
    %s9 = sphi 0, %s13
    %p10 = scmp.ge.s32.totalorder %s9, 4
    %s16 = sphi 0, %s28
    %s17 = sphi 0, %s24
    %s18 = sphi 0, %s16
    %s19 = sphi 0, %s17
    %s20 = sphi 0, %s18
    %s21 = sphi 0, %s19
    %s33 = sphi 0, %s35
    %s36 = sphi 0, %s33
    %s37 = sphi 0, %s36
    %s53 = sphi 0, %s37
    %s57 = sphi 0, %s57
    %s59 = sphi 0, %s57
    %s60 = sphi 0, %s59
    %s74 = sphi 0, %s60
    %s78 = sphi 0, %s78
    %s80 = sphi 0, %s78
    %s81 = sphi 0, %s80
    %s95 = sphi 0, %s81
    %s103 = sphi 0, %s105
    %s106 = sphi 0, %s103
    %s107 = sphi 0, %s106
    %s123 = sphi 0, %s107
  $region4: #{downsample_forward.1} parent=0 // loop_header_branch
    %12 = sbr.rel (%p10) target = $region8
  $region5: #{downsample_forward.1} parent=0 // loop_body
    %s14 = ssub.s32 %s9, 1
    %s15 = ssub.s32 %s9, 2
    %s22 = sadd.s32 1, %s17
    %p23 = scmp.ge.s32.totalorder %s22, 1
    %s24 = scalar_select %p23, 0, %s22
    %s25 = sadd.s32 1, %s16
    %s26 = scalar_select %p23, %s25, %s16
    %p27 = scmp.ge.s32.totalorder %s26, 2
    %s28 = scalar_select %p27, 0, %s26
    %s29 = ssub.s32 %s16, %s28
    %s30 = ssub.s32 %s17, %s24
    %s31 = sor.u32 %s29, %s30
    %p32 = scmp.eq.s32.totalorder %s31, 0
    %s34 = sadd.s32 %s33, 1
    %s35 = scalar_select %p32, %s33, %s34
    %p38 = pneg %p32
    %p39 = scmp.eq.s32.totalorder %s9, 1
    %p40 = por %p38, %p39
    %p41 = scmp.ne.s32.totalorder %s33, %s36
    %p42 = scmp.eq.s32.totalorder %s9, 0
    %p43 = por %p41, %p42
    %p44 = scmp.ne.s32.totalorder %s33, %s36
    %p45 = scmp.eq.s32.totalorder %s14, 1
    %p46 = por %p44, %p45
    %p47 = scmp.ne.s32.totalorder %s36, %s37
    %p48 = scmp.eq.s32.totalorder %s14, 0
    %p49 = por %p47, %p48
    %p50 = scmp.ne.s32.totalorder %s36, %s37
    %p51 = scmp.eq.s32.totalorder %s15, 1
    %p52 = por %p50, %p51
    %p54 = scmp.ne.s32.totalorder %s37, %s53
    %p55 = scmp.eq.s32.totalorder %s15, 0
    %p56 = por %p54, %p55
    %s58 = sadd.s32 %s57, 1
    %p61 = scmp.eq.s32.totalorder %s9, 1
    %p62 = scmp.ne.s32.totalorder %s57, %s59
    %p63 = scmp.eq.s32.totalorder %s9, 0
    %p64 = por %p62, %p63
    %p65 = scmp.ne.s32.totalorder %s57, %s59
    %p66 = scmp.eq.s32.totalorder %s14, 1
    %p67 = por %p65, %p66
    %p68 = scmp.ne.s32.totalorder %s59, %s60
    %p69 = scmp.eq.s32.totalorder %s14, 0
    %p70 = por %p68, %p69
    %p71 = scmp.ne.s32.totalorder %s59, %s60
    %p72 = scmp.eq.s32.totalorder %s15, 1
    %p73 = por %p71, %p72
    %p75 = scmp.ne.s32.totalorder %s60, %s74
    %p76 = scmp.eq.s32.totalorder %s15, 0
    %p77 = por %p75, %p76
    %s79 = sadd.s32 %s78, 1
    %p82 = scmp.eq.s32.totalorder %s9, 1
    %p83 = scmp.ne.s32.totalorder %s78, %s80
    %p84 = scmp.eq.s32.totalorder %s9, 0
    %p85 = por %p83, %p84
    %p86 = scmp.ne.s32.totalorder %s78, %s80
    %p87 = scmp.eq.s32.totalorder %s14, 1
    %p88 = por %p86, %p87
    %p89 = scmp.ne.s32.totalorder %s80, %s81
    %p90 = scmp.eq.s32.totalorder %s14, 0
    %p91 = por %p89, %p90
    %p92 = scmp.ne.s32.totalorder %s80, %s81
    %p93 = scmp.eq.s32.totalorder %s15, 1
    %p94 = por %p92, %p93
    %p96 = scmp.ne.s32.totalorder %s81, %s95
    %p97 = scmp.eq.s32.totalorder %s15, 0
    %p98 = por %p96, %p97
    %s99 = ssub.s32 %s16, %s28
    %s100 = ssub.s32 %s17, %s24
    %s101 = sor.u32 %s99, %s100
    %p102 = scmp.eq.s32.totalorder %s101, 0
    %s104 = sadd.s32 %s103, 1
    %s105 = scalar_select %p102, %s103, %s104
    %p108 = pneg %p102
    %p109 = scmp.eq.s32.totalorder %s9, 1
    %p110 = por %p108, %p109
    %p111 = scmp.ne.s32.totalorder %s103, %s106
    %p112 = scmp.eq.s32.totalorder %s9, 0
    %p113 = por %p111, %p112
    %p114 = scmp.ne.s32.totalorder %s103, %s106
    %p115 = scmp.eq.s32.totalorder %s14, 1
    %p116 = por %p114, %p115
    %p117 = scmp.ne.s32.totalorder %s106, %s107
    %p118 = scmp.eq.s32.totalorder %s14, 0
    %p119 = por %p117, %p118
    %p120 = scmp.ne.s32.totalorder %s106, %s107
    %p121 = scmp.eq.s32.totalorder %s15, 1
    %p122 = por %p120, %p121
    %p124 = scmp.ne.s32.totalorder %s107, %s123
    %p125 = scmp.eq.s32.totalorder %s15, 0
    %p126 = por %p124, %p125
    %p127 = scmp.le.s32.totalorder 1, %s9
    %p128 = scmp.lt.s32.totalorder %s9, 3
    %p129 = pnand %p127, %p128
    %p130 = pneg %p129
    // Predicated region
    $region9: #{downsample_forward.1} parent=5 // pred_check
      _
    $region10: #{downsample_forward.1} parent=5 // pred_check_branch
      %132 = sbr.rel (%p129) target = $region12
    $region11: #{downsample_forward.1} parent=5 // pred_region
      %s133 = ssub.s32 %s9, 1
      // Predicated region
      $region13: #{downsample_forward.1} parent=11 // pred_check
        %p134 = pneg %p70
      $region14: #{downsample_forward.1} parent=11 // pred_check_branch
        %136 = sbr.rel (%p134) target = $region16
      $region15: #{downsample_forward.1} parent=11 // pred_region
        _
      $region16: #{downsample_forward.1} parent=11 // pred_fallthru
        _
      // Predicated region
      $region17: #{downsample_forward.1} parent=11 // pred_check
        %p137 = pneg %p91
      $region18: #{downsample_forward.1} parent=11 // pred_check_branch
        %139 = sbr.rel (%p137) target = $region20
      $region19: #{downsample_forward.1} parent=11 // pred_region
        _
      $region20: #{downsample_forward.1} parent=11 // pred_fallthru
        _
    $region12: #{downsample_forward.1} parent=5 // pred_fallthru
      _
    %p140 = scmp.lt.s32.totalorder %s9, 2
    // Predicated region
    $region21: #{downsample_forward.1} parent=5 // pred_check
      %p141 = pneg %p140
    $region22: #{downsample_forward.1} parent=5 // pred_check_branch
      %143 = sbr.rel (%p141) target = $region24
    $region23: #{downsample_forward.1} parent=5 // pred_region
      // Predicated region
      $region25: #{downsample_forward.1} parent=23 // pred_check
        %p144 = pneg %p43
      $region26: #{downsample_forward.1} parent=23 // pred_check_branch
        %146 = sbr.rel (%p144) target = $region28
      $region27: #{downsample_forward.1} parent=23 // pred_region
        %s147 = smul.u32 2, %s17
        %p148 = scmp.lt.s32.totalorder %s16, 1
        %s149 = scalar_select %p148, %s16, 1
        %p150 = scmp.lt.s32.totalorder %s147, 1
        %s151 = scalar_select %p150, %s147, 1
        %s152 = smul.addr %s149, 8
        %s153 = sadd.s32 %s151, %s152
        %s154 = smul.addr %s153, 8
        %s155 = scalar_lea.vmem %s0, %s154
        %s156 = smul.u32 2, %s17
      $region28: #{downsample_forward.1} parent=23 // pred_fallthru
        _
    $region24: #{downsample_forward.1} parent=5 // pred_fallthru
      _
    %p157 = scmp.le.s32.totalorder 1, %s9
    %p158 = scmp.lt.s32.totalorder %s9, 3
    %p159 = pnand %p157, %p158
    %p160 = pneg %p159
    // Predicated region
    $region29: #{downsample_forward.1} parent=5 // pred_check
      _
    $region30: #{downsample_forward.1} parent=5 // pred_check_branch
      %162 = sbr.rel (%p159) target = $region32
    $region31: #{downsample_forward.1} parent=5 // pred_region
      %s163 = ssub.s32 %s9, 1
      %s164 = smul.u32 2, %s19
      %p165 = scmp.lt.s32.totalorder %s18, 1
      %s166 = scalar_select %p165, %s18, 1
      %p167 = scmp.lt.s32.totalorder %s164, 1
      %s168 = scalar_select %p167, %s164, 1
      %s169 = smul.addr %s166, 8
      %s170 = sadd.s32 %s168, %s169
      %s171 = smul.addr %s170, 8
      %s172 = scalar_lea.vmem %s0, %s171
      %p173 = pneg %p49
      %p174 = pneg %p46
      %p175 = pneg %p70
      %p176 = pneg %p67
      %p177 = pneg %p91
      %p178 = pneg %p88
      %p179 = pneg %p119
      %p180 = pneg %p116
      %s181 = smul.u32 2, %s19
      %p182 = scmp.lt.s32.totalorder %s18, 1
      %s183 = scalar_select %p182, %s18, 1
      %p184 = scmp.lt.s32.totalorder %s181, 1
      %s185 = scalar_select %p184, %s181, 1
      %s186 = smul.addr %s183, 2
      %s187 = sadd.s32 %s185, %s186
      %s188 = smul.addr %s187, 8
      %s189 = scalar_lea.vmem %s3, %s188
      %s190 = smul.u32 2, %s19
      %p191 = scmp.lt.s32.totalorder %s18, 1
      %s192 = scalar_select %p191, %s18, 1
      %p193 = scmp.lt.s32.totalorder %s190, 1
      %s194 = scalar_select %p193, %s190, 1
      %s195 = smul.addr %s192, 8
      %s196 = sadd.s32 %s194, %s195
      %s197 = smul.addr %s196, 8
      %s198 = scalar_lea.vmem %s0, %s197
      %s199 = smul.u32 2, %s19
      %s200 = smul.u32 2, %s19
      %p201 = scmp.lt.s32.totalorder %s18, 1
      %s202 = scalar_select %p201, %s18, 1
      %p203 = scmp.lt.s32.totalorder %s200, 1
      %s204 = scalar_select %p203, %s200, 1
      %s205 = smul.addr %s202, 2
      %s206 = sadd.s32 %s204, %s205
      %s207 = smul.addr %s206, 8
      %s208 = scalar_lea.vmem %s3, %s207
      %s209 = smul.u32 2, %s19
      %v210 = vld [vmem:[%s198] sm:$0xff]
      %v211 = vld [vmem:[%s198 + $0x8] sm:$0xff]
      %v212 = vld [vmem:[%s1] sm:$0xff]
      %v213 = vld [vmem:[%s1 + $0x8] sm:$0xff]
      %s214 = scalar_lea.vmem %s198, 16
      %v215 = vld [vmem:[%s214] sm:$0xff]
      %v216 = vld [vmem:[%s214 + $0x8] sm:$0xff]
      %s217 = scalar_lea.vmem %s1, 16
      %v218 = vld [vmem:[%s217] sm:$0xff]
      %v219 = vld [vmem:[%s217 + $0x8] sm:$0xff]
      %vm220 = vcmask 130048
      %v222 = vsel %vm220, %v215, 0
      %v225 = vsel %vm220, %v216, 0
      %227 = vmatprep.subr.mxu0 0.0
      %228 = vmatpush1.msra.mxu0 %v218
      %229 = vmatprep.subr.mxu0 0.0
      %230 = vmatpush1.msra.mxu0 %v219
      %231 = vmatprep.subr.mxu0 0.0
      %232 = vmatpush1.msra.mxu0 0.0
      %233 = vmatprep.subr.mxu0 0.0
      %234 = vmatpush1.msra.mxu0 0.0
      %235 = vmatprep.subr.mxu0 0.0
      %236 = vmatpush1.msra.mxu0 0.0
      %237 = vmatprep.subr.mxu0 0.0
      %238 = vmatpush1.msra.mxu0 0.0
      %239 = vmatprep.subr.mxu0 0.0
      %240 = vmatpush1.msra.mxu0 0.0
      %241 = vmatprep.subr.mxu0 0.0
      %242 = vmatpush1.msra.mxu0 0.0
      %243 = vmatprep.subr.mxu0 0.0
      %244 = vmatpush1.msra.mxu0 0.0
      %245 = vmatprep.subr.mxu0 0.0
      %246 = vmatpush1.msra.mxu0 0.0
      %247 = vmatprep.subr.mxu0 0.0
      %248 = vmatpush1.msra.mxu0 0.0
      %249 = vmatprep.subr.mxu0 0.0
      %250 = vmatpush1.msra.mxu0 0.0
      %251 = vmatprep.subr.mxu0 0.0
      %252 = vmatpush1.msra.mxu0 0.0
      %253 = vmatprep.subr.mxu0 0.0
      %254 = vmatpush1.msra.mxu0 0.0
      %255 = vmatprep.subr.mxu0 0.0
      %256 = vmatpush1.msra.mxu0 0.0
      %257 = vmatprep.subr.mxu0 0.0
      %258 = vmatpush1.msra.mxu0 0.0
      %259 = vmatprep.subr.mxu0 0.0
      %260 = vmatpush1.msra.mxu0 0.0
      %261 = vmatprep.subr.mxu0 0.0
      %262 = vmatpush1.msra.mxu0 0.0
      %263 = vmatprep.subr.mxu0 0.0
      %264 = vmatpush1.msra.mxu0 0.0
      %265 = vmatprep.subr.mxu0 0.0
      %266 = vmatpush1.msra.mxu0 0.0
      %267 = vmatprep.subr.mxu0 0.0
      %268 = vmatpush1.msra.mxu0 0.0
      %269 = vmatprep.subr.mxu0 0.0
      %270 = vmatpush1.msra.mxu0 0.0
      %271 = vmatprep.subr.mxu0 0.0
      %272 = vmatpush1.msra.mxu0 0.0
      %273 = vmatprep.subr.mxu0 0.0
      %274 = vmatpush1.msra.mxu0 0.0
      %275 = vmatprep.subr.mxu0 0.0
      %276 = vmatpush1.msra.mxu0 0.0
      %277 = vmatprep.subr.mxu0 0.0
      %278 = vmatpush1.msra.mxu0 0.0
      %279 = vmatprep.subr.mxu0 0.0
      %280 = vmatpush1.msra.mxu0 0.0
      %281 = vmatprep.subr.mxu0 0.0
      %282 = vmatpush1.msra.mxu0 0.0
      %283 = vmatprep.subr.mxu0 0.0
      %284 = vmatpush1.msra.mxu0 0.0
      %285 = vmatprep.subr.mxu0 0.0
      %286 = vmatpush1.msra.mxu0 0.0
      %287 = vmatprep.subr.mxu0 0.0
      %288 = vmatpush1.msra.mxu0 0.0
      %289 = vmatprep.subr.mxu0 0.0
      %290 = vmatpush1.msra.mxu0 0.0
      %291 = vmatprep.mubr.f32.mxu0 0.0
      %292 = vmatmul.mubr.f32.gmra.mrb[0].mxu0 %v222
      %v293 = vpop.f32.mrb[0].mxu0
      %v294 = vadd.f32 0.0, %v293
      %v295 = vpop.f32.mrb[0].mxu0
      %296 = vmatprep.mubr.f32.mxu0 0.0
      %297 = vmatmul.mubr.f32.gmra.mrb[0].mxu0 %v225
      %v298 = vpop.f32.mrb[0].mxu0
      %v299 = vadd.f32 0.0, %v298
      %v300 = vpop.f32.mrb[0].mxu0
      %301 = vdwg.mxu0
      %v303 = vsel %vm220, %v210, 0
      %v306 = vsel %vm220, %v211, 0
      %308 = vmatprep.subr.mxu0 0.0
      %309 = vmatpush1.msra.mxu0 %v212
      %310 = vmatprep.subr.mxu0 0.0
      %311 = vmatpush1.msra.mxu0 %v213
      %312 = vmatprep.subr.mxu0 0.0
      %313 = vmatpush1.msra.mxu0 0.0
      %314 = vmatprep.subr.mxu0 0.0
      %315 = vmatpush1.msra.mxu0 0.0
      %316 = vmatprep.subr.mxu0 0.0
      %317 = vmatpush1.msra.mxu0 0.0
      %318 = vmatprep.subr.mxu0 0.0
      %319 = vmatpush1.msra.mxu0 0.0
      %320 = vmatprep.subr.mxu0 0.0
      %321 = vmatpush1.msra.mxu0 0.0
      %322 = vmatprep.subr.mxu0 0.0
      %323 = vmatpush1.msra.mxu0 0.0
      %324 = vmatprep.subr.mxu0 0.0
      %325 = vmatpush1.msra.mxu0 0.0
      %326 = vmatprep.subr.mxu0 0.0
      %327 = vmatpush1.msra.mxu0 0.0
      %328 = vmatprep.subr.mxu0 0.0
      %329 = vmatpush1.msra.mxu0 0.0
      %330 = vmatprep.subr.mxu0 0.0
      %331 = vmatpush1.msra.mxu0 0.0
      %332 = vmatprep.subr.mxu0 0.0
      %333 = vmatpush1.msra.mxu0 0.0
      %334 = vmatprep.subr.mxu0 0.0
      %335 = vmatpush1.msra.mxu0 0.0
      %336 = vmatprep.subr.mxu0 0.0
      %337 = vmatpush1.msra.mxu0 0.0
      %338 = vmatprep.subr.mxu0 0.0
      %339 = vmatpush1.msra.mxu0 0.0
      %340 = vmatprep.subr.mxu0 0.0
      %341 = vmatpush1.msra.mxu0 0.0
      %342 = vmatprep.subr.mxu0 0.0
      %343 = vmatpush1.msra.mxu0 0.0
      %344 = vmatprep.subr.mxu0 0.0
      %345 = vmatpush1.msra.mxu0 0.0
      %346 = vmatprep.subr.mxu0 0.0
      %347 = vmatpush1.msra.mxu0 0.0
      %348 = vmatprep.subr.mxu0 0.0
      %349 = vmatpush1.msra.mxu0 0.0
      %350 = vmatprep.subr.mxu0 0.0
      %351 = vmatpush1.msra.mxu0 0.0
      %352 = vmatprep.subr.mxu0 0.0
      %353 = vmatpush1.msra.mxu0 0.0
      %354 = vmatprep.subr.mxu0 0.0
      %355 = vmatpush1.msra.mxu0 0.0
      %356 = vmatprep.subr.mxu0 0.0
      %357 = vmatpush1.msra.mxu0 0.0
      %358 = vmatprep.subr.mxu0 0.0
      %359 = vmatpush1.msra.mxu0 0.0
      %360 = vmatprep.subr.mxu0 0.0
      %361 = vmatpush1.msra.mxu0 0.0
      %362 = vmatprep.subr.mxu0 0.0
      %363 = vmatpush1.msra.mxu0 0.0
      %364 = vmatprep.subr.mxu0 0.0
      %365 = vmatpush1.msra.mxu0 0.0
      %366 = vmatprep.subr.mxu0 0.0
      %367 = vmatpush1.msra.mxu0 0.0
      %368 = vmatprep.subr.mxu0 0.0
      %369 = vmatpush1.msra.mxu0 0.0
      %370 = vmatprep.subr.mxu0 0.0
      %371 = vmatpush1.msra.mxu0 0.0
      %372 = vmatprep.mubr.f32.mxu0 0.0
      %373 = vmatmul.mubr.f32.gmra.mrb[0].mxu0 %v303
      %v374 = vpop.f32.mrb[0].mxu0
      %v375 = vadd.f32 %v294, %v374
      %v376 = vpop.f32.mrb[0].mxu0
      %377 = vmatprep.mubr.f32.mxu0 0.0
      %378 = vmatmul.mubr.f32.gmra.mrb[0].mxu0 %v306
      %v379 = vpop.f32.mrb[0].mxu0
      %v380 = vadd.f32 %v299, %v379
      %v381 = vpop.f32.mrb[0].mxu0
      %382 = vdwg.mxu0
      %s383 = scalar_lea.vmem %s198, 32
      %v384 = vld [vmem:[%s383] sm:$0xff]
      %v385 = vld [vmem:[%s383 + $0x8] sm:$0xff]
      %s386 = scalar_lea.vmem %s1, 32
      %v387 = vld [vmem:[%s386] sm:$0xff]
      %v388 = vld [vmem:[%s386 + $0x8] sm:$0xff]
      %v390 = vsel %vm220, %v384, 0
      %v393 = vsel %vm220, %v385, 0
      %395 = vmatprep.subr.mxu0 0.0
      %396 = vmatpush1.msra.mxu0 %v387
      %397 = vmatprep.subr.mxu0 0.0
      %398 = vmatpush1.msra.mxu0 %v388
      %399 = vmatprep.subr.mxu0 0.0
      %400 = vmatpush1.msra.mxu0 0.0
      %401 = vmatprep.subr.mxu0 0.0
      %402 = vmatpush1.msra.mxu0 0.0
      %403 = vmatprep.subr.mxu0 0.0
      %404 = vmatpush1.msra.mxu0 0.0
      %405 = vmatprep.subr.mxu0 0.0
      %406 = vmatpush1.msra.mxu0 0.0
      %407 = vmatprep.subr.mxu0 0.0
      %408 = vmatpush1.msra.mxu0 0.0
      %409 = vmatprep.subr.mxu0 0.0
      %410 = vmatpush1.msra.mxu0 0.0
      %411 = vmatprep.subr.mxu0 0.0
      %412 = vmatpush1.msra.mxu0 0.0
      %413 = vmatprep.subr.mxu0 0.0
      %414 = vmatpush1.msra.mxu0 0.0
      %415 = vmatprep.subr.mxu0 0.0
      %416 = vmatpush1.msra.mxu0 0.0
      %417 = vmatprep.subr.mxu0 0.0
      %418 = vmatpush1.msra.mxu0 0.0
      %419 = vmatprep.subr.mxu0 0.0
      %420 = vmatpush1.msra.mxu0 0.0
      %421 = vmatprep.subr.mxu0 0.0
      %422 = vmatpush1.msra.mxu0 0.0
      %423 = vmatprep.subr.mxu0 0.0
      %424 = vmatpush1.msra.mxu0 0.0
      %425 = vmatprep.subr.mxu0 0.0
      %426 = vmatpush1.msra.mxu0 0.0
      %427 = vmatprep.subr.mxu0 0.0
      %428 = vmatpush1.msra.mxu0 0.0
      %429 = vmatprep.subr.mxu0 0.0
      %430 = vmatpush1.msra.mxu0 0.0
      %431 = vmatprep.subr.mxu0 0.0
      %432 = vmatpush1.msra.mxu0 0.0
      %433 = vmatprep.subr.mxu0 0.0
      %434 = vmatpush1.msra.mxu0 0.0
      %435 = vmatprep.subr.mxu0 0.0
      %436 = vmatpush1.msra.mxu0 0.0
      %437 = vmatprep.subr.mxu0 0.0
      %438 = vmatpush1.msra.mxu0 0.0
      %439 = vmatprep.subr.mxu0 0.0
      %440 = vmatpush1.msra.mxu0 0.0
      %441 = vmatprep.subr.mxu0 0.0
      %442 = vmatpush1.msra.mxu0 0.0
      %443 = vmatprep.subr.mxu0 0.0
      %444 = vmatpush1.msra.mxu0 0.0
      %445 = vmatprep.subr.mxu0 0.0
      %446 = vmatpush1.msra.mxu0 0.0
      %447 = vmatprep.subr.mxu0 0.0
      %448 = vmatpush1.msra.mxu0 0.0
      %449 = vmatprep.subr.mxu0 0.0
      %450 = vmatpush1.msra.mxu0 0.0
      %451 = vmatprep.subr.mxu0 0.0
      %452 = vmatpush1.msra.mxu0 0.0
      %453 = vmatprep.subr.mxu0 0.0
      %454 = vmatpush1.msra.mxu0 0.0
      %455 = vmatprep.subr.mxu0 0.0
      %456 = vmatpush1.msra.mxu0 0.0
      %457 = vmatprep.subr.mxu0 0.0
      %458 = vmatpush1.msra.mxu0 0.0
      %459 = vmatprep.mubr.f32.mxu0 0.0
      %460 = vmatmul.mubr.f32.gmra.mrb[0].mxu0 %v390
      %v461 = vpop.f32.mrb[0].mxu0
      %v462 = vadd.f32 0.0, %v461
      %v463 = vpop.f32.mrb[0].mxu0
      %464 = vmatprep.mubr.f32.mxu0 0.0
      %465 = vmatmul.mubr.f32.gmra.mrb[0].mxu0 %v393
      %v466 = vpop.f32.mrb[0].mxu0
      %v467 = vadd.f32 0.0, %v466
      %v468 = vpop.f32.mrb[0].mxu0
      %469 = vdwg.mxu0
      %v470 = vadd.f32 %v375, %v462
      %v471 = vadd.f32 %v380, %v467
      %s472 = scalar_lea.vmem %s198, 48
      %v473 = vld [vmem:[%s472] sm:$0xff]
      %v474 = vld [vmem:[%s472 + $0x8] sm:$0xff]
      %s475 = scalar_lea.vmem %s1, 48
      %v476 = vld [vmem:[%s475] sm:$0xff]
      %v477 = vld [vmem:[%s475 + $0x8] sm:$0xff]
      %v479 = vsel %vm220, %v473, 0
      %v482 = vsel %vm220, %v474, 0
      %484 = vmatprep.subr.mxu0 0.0
      %485 = vmatpush1.msra.mxu0 %v476
      %486 = vmatprep.subr.mxu0 0.0
      %487 = vmatpush1.msra.mxu0 %v477
      %488 = vmatprep.subr.mxu0 0.0
      %489 = vmatpush1.msra.mxu0 0.0
      %490 = vmatprep.subr.mxu0 0.0
      %491 = vmatpush1.msra.mxu0 0.0
      %492 = vmatprep.subr.mxu0 0.0
      %493 = vmatpush1.msra.mxu0 0.0
      %494 = vmatprep.subr.mxu0 0.0
      %495 = vmatpush1.msra.mxu0 0.0
      %496 = vmatprep.subr.mxu0 0.0
      %497 = vmatpush1.msra.mxu0 0.0
      %498 = vmatprep.subr.mxu0 0.0
      %499 = vmatpush1.msra.mxu0 0.0
      %500 = vmatprep.subr.mxu0 0.0
      %501 = vmatpush1.msra.mxu0 0.0
      %502 = vmatprep.subr.mxu0 0.0
      %503 = vmatpush1.msra.mxu0 0.0
      %504 = vmatprep.subr.mxu0 0.0
      %505 = vmatpush1.msra.mxu0 0.0
      %506 = vmatprep.subr.mxu0 0.0
      %507 = vmatpush1.msra.mxu0 0.0
      %508 = vmatprep.subr.mxu0 0.0
      %509 = vmatpush1.msra.mxu0 0.0
      %510 = vmatprep.subr.mxu0 0.0
      %511 = vmatpush1.msra.mxu0 0.0
      %512 = vmatprep.subr.mxu0 0.0
      %513 = vmatpush1.msra.mxu0 0.0
      %514 = vmatprep.subr.mxu0 0.0
      %515 = vmatpush1.msra.mxu0 0.0
      %516 = vmatprep.subr.mxu0 0.0
      %517 = vmatpush1.msra.mxu0 0.0
      %518 = vmatprep.subr.mxu0 0.0
      %519 = vmatpush1.msra.mxu0 0.0
      %520 = vmatprep.subr.mxu0 0.0
      %521 = vmatpush1.msra.mxu0 0.0
      %522 = vmatprep.subr.mxu0 0.0
      %523 = vmatpush1.msra.mxu0 0.0
      %524 = vmatprep.subr.mxu0 0.0
      %525 = vmatpush1.msra.mxu0 0.0
      %526 = vmatprep.subr.mxu0 0.0
      %527 = vmatpush1.msra.mxu0 0.0
      %528 = vmatprep.subr.mxu0 0.0
      %529 = vmatpush1.msra.mxu0 0.0
      %530 = vmatprep.subr.mxu0 0.0
      %531 = vmatpush1.msra.mxu0 0.0
      %532 = vmatprep.subr.mxu0 0.0
      %533 = vmatpush1.msra.mxu0 0.0
      %534 = vmatprep.subr.mxu0 0.0
      %535 = vmatpush1.msra.mxu0 0.0
      %536 = vmatprep.subr.mxu0 0.0
      %537 = vmatpush1.msra.mxu0 0.0
      %538 = vmatprep.subr.mxu0 0.0
      %539 = vmatpush1.msra.mxu0 0.0
      %540 = vmatprep.subr.mxu0 0.0
      %541 = vmatpush1.msra.mxu0 0.0
      %542 = vmatprep.subr.mxu0 0.0
      %543 = vmatpush1.msra.mxu0 0.0
      %544 = vmatprep.subr.mxu0 0.0
      %545 = vmatpush1.msra.mxu0 0.0
      %546 = vmatprep.subr.mxu0 0.0
      %547 = vmatpush1.msra.mxu0 0.0
      %548 = vmatprep.mubr.f32.mxu0 0.0
      %549 = vmatmul.mubr.f32.gmra.mrb[0].mxu0 %v479
      %v550 = vpop.f32.mrb[0].mxu0
      %v551 = vadd.f32 0.0, %v550
      %v552 = vpop.f32.mrb[0].mxu0
      %553 = vmatprep.mubr.f32.mxu0 0.0
      %554 = vmatmul.mubr.f32.gmra.mrb[0].mxu0 %v482
      %v555 = vpop.f32.mrb[0].mxu0
      %v556 = vadd.f32 0.0, %v555
      %v557 = vpop.f32.mrb[0].mxu0
      %558 = vdwg.mxu0
      %v559 = vadd.f32 %v470, %v551
      %v560 = vadd.f32 %v471, %v556
      %v561 = vld [vmem:[%s2] sm:$0x1]
      %v563 = vlaneseq
      %v564 = vshrl.u32 %v563, 7
      %v565 = vsub.s32 0, %v564
      %v566 = vrot.slane %v561, %v565
      %v568 = vadd.f32 %v559, %v566
      %v569 = vadd.f32 %v560, %v566
      %vm570 = vcmask 261120
      %571 = vst.msk [vmem:[%s208] sm:$0xff] %vm570, %v568
      %572 = vst.msk [vmem:[%s208 + $0x8] sm:$0xff] %vm570, %v569
      %s573 = smul.u32 2, %s19
      %p574 = scmp.lt.s32.totalorder %s18, 1
      %s575 = scalar_select %p574, %s18, 1
      %p576 = scmp.lt.s32.totalorder %s573, 1
      %s577 = scalar_select %p576, %s573, 1
      %s578 = smul.addr %s575, 2
      %s579 = sadd.s32 %s577, %s578
      %s580 = smul.addr %s579, 8
      %s581 = scalar_lea.vmem %s3, %s580
      // Predicated region
      $region33: #{downsample_forward.1} parent=31 // pred_check
        %p582 = pneg %p116
      $region34: #{downsample_forward.1} parent=31 // pred_check_branch
        %584 = sbr.rel (%p582) target = $region36
      $region35: #{downsample_forward.1} parent=31 // pred_region
        %s585 = smul.u32 2, %s19
      $region36: #{downsample_forward.1} parent=31 // pred_fallthru
        _
    $region32: #{downsample_forward.1} parent=5 // pred_fallthru
      _
    %p586 = scmp.le.s32.totalorder 2, %s9
    // Predicated region
    $region37: #{downsample_forward.1} parent=5 // pred_check
      %p587 = pneg %p586
    $region38: #{downsample_forward.1} parent=5 // pred_check_branch
      %589 = sbr.rel (%p587) target = $region40
    $region39: #{downsample_forward.1} parent=5 // pred_region
      %s590 = ssub.s32 %s9, 2
      // Predicated region
      $region41: #{downsample_forward.1} parent=39 // pred_check
        %p591 = pneg %p122
      $region42: #{downsample_forward.1} parent=39 // pred_check_branch
        %593 = sbr.rel (%p591) target = $region44
      $region43: #{downsample_forward.1} parent=39 // pred_region
        %s594 = smul.u32 2, %s21
        %p595 = scmp.lt.s32.totalorder %s20, 1
        %s596 = scalar_select %p595, %s20, 1
        %p597 = scmp.lt.s32.totalorder %s594, 1
        %s598 = scalar_select %p597, %s594, 1
        %s599 = smul.addr %s596, 2
        %s600 = sadd.s32 %s598, %s599
        %s601 = smul.addr %s600, 8
        %s602 = scalar_lea.vmem %s3, %s601
      $region44: #{downsample_forward.1} parent=39 // pred_fallthru
        _
    $region40: #{downsample_forward.1} parent=5 // pred_fallthru
      _
  $region6: #{downsample_forward.1} parent=0 // loop_footer
    %s13 = sadd.s32 1, %s9
  $region7: #{downsample_forward.1} parent=0 // loop_footer_branch
    %8 = sbr.rel target = $region3
  $region8: #{downsample_forward.1} parent=0 // loop_exit
    _

</llo_original>
